<compile_context>
chip_gen: v7x
topology: tpu7x:2x2x1
jax: 0.10.0
libtpu: 0.0.40
codegen_flags: <defaults>
</compile_context>

<pallas_src>
import functools

import jax
import jax.numpy as jnp
from jax.experimental import pallas as pl
from jax.experimental.pallas import tpu as pltpu


def _moving_avg_kernel(x_ref, o_ref, *scratch, K, stride, pad, base, L, L_out):
    # x_ref : (L, nt)      time-major input slab (nt lanes of padded B*C)
    # o_ref : (L_out, nt)  pooled output slab
    # scratch (only when K >= 2):
    #   buf_ref : (base + L_pad, nt) f32 level buffer; level index r lives at row
    #             base + r, base chosen so the bulk store row (base + pad) is 8-aligned.
    #   acc_ref : (L_out, nt) f32 partial-window accumulator (stride == 1 and
    #             popcount(K) >= 2 only).
    nt = x_ref.shape[-1]
    f32 = jnp.float32
    inv_k = 1.0 / K
    L_pad = L + 2 * pad

    if K == 1:
        if stride == 1:
            o_ref[...] = x_ref[...]
        else:
            o_ref[...] = x_ref[pl.ds(0, L_out, stride=stride), :]
        return

    buf_ref = scratch[0]
    acc_ref = scratch[1] if len(scratch) > 1 else None

    x0 = x_ref[0:1, :].astype(f32)          # first row (front replication pad)
    xl = x_ref[L - 1:L, :].astype(f32)      # last row  (end replication pad)

    if stride == 1:
        # Binary-decomposition sliding-window sums: O(log K) adds per element,
        # each level written back in place into buf_ref.
        first = True

        def emit_piece(piece, is_last):
            nonlocal first
            if is_last:
                if first:
                    o_ref[...] = (piece * inv_k).astype(o_ref.dtype)
                else:
                    o_ref[...] = ((acc_ref[...] + piece) * inv_k).astype(o_ref.dtype)
            else:
                if first:
                    acc_ref[...] = piece
                else:
                    acc_ref[...] = acc_ref[...] + piece
            first = False

        shift = 0
        # Bit 0 (window length 1): served straight from x_ref -- the padded
        # series is never materialised at window length 1 (no copy pass).
        # padded[r], r in [0, L_out), never reaches the end pad, so it is x[0]
        # for r < pad and x[r - pad] afterwards.  K odd (>=3) always has higher
        # set bits, so this piece initialises acc_ref.
        if K & 1:
            h = min(pad, L_out)
            if h > 0:
                acc_ref[pl.ds(0, h), :] = jnp.broadcast_to(x0, (h, nt))
            if L_out > pad:
                acc_ref[pl.ds(pad, L_out - pad), :] = x_ref[0:L_out - pad, :].astype(f32)
            first = False
            shift = 1

        # Level 1 -> 2, written straight from x_ref with the replication padding
        # folded in.  The bulk store starts at row base + pad (multiple of 8).
        buf_ref[pl.ds(base + pad, L - 1), :] = (
            x_ref[0:L - 1, :].astype(f32) + x_ref[1:L, :].astype(f32))
        if pad > 0:
            buf_ref[pl.ds(base, pad), :] = jnp.broadcast_to(x0 + x0, (pad, nt))
            buf_ref[pl.ds(base + pad + L - 1, pad), :] = jnp.broadcast_to(xl + xl, (pad, nt))

        m, b = 2, 1
        while True:
            if (K >> b) & 1:
                is_last = (K >> (b + 1)) == 0
                emit_piece(buf_ref[pl.ds(base + shift, L_out), :], is_last)
                shift += m
                if is_last:
                    break
            # Double window length in place: level(2m)[r] = level(m)[r] + level(m)[r+m]
            n_next = L_pad - 2 * m + 1
            buf_ref[pl.ds(base, n_next), :] = (
                buf_ref[pl.ds(base, n_next), :] + buf_ref[pl.ds(base + m, n_next), :])
            m *= 2
            b += 1
    else:
        # General stride (rare for Autoformer): padded copy (bulk store 8-aligned)
        # followed by K strided-window accumulations.
        buf_ref[pl.ds(base + pad, L), :] = x_ref[...].astype(f32)
        if pad > 0:
            buf_ref[pl.ds(base, pad), :] = jnp.broadcast_to(x0, (pad, nt))
            buf_ref[pl.ds(base + pad + L, pad), :] = jnp.broadcast_to(xl, (pad, nt))
        acc = buf_ref[pl.ds(base, L_out, stride=stride), :]
        for j in range(1, K):
            acc = acc + buf_ref[pl.ds(base + j, L_out, stride=stride), :]
        o_ref[...] = (acc * inv_k).astype(o_ref.dtype)


def _round_up(v, m):
    return -(-v // m) * m


def _vmem_capacity_bytes():
    # Generation-aware budgeting (v5e/v6e: 128 MiB per TC, v7x: 64 MiB).
    try:
        return int(pltpu.get_tpu_info().vmem_capacity_bytes)
    except Exception:
        return 64 * 1024 * 1024      # conservative fallback (v7x per-TC size)


def moving_avg(x, kernel_size, stride):
    """Pallas equivalent of PowerMamba/Autoformer moving_avg.forward, x: (B, L, C)."""
    assert kernel_size >= 1 and stride >= 1
    B, L, C = x.shape
    K = int(kernel_size)
    stride = int(stride)
    pad = (K - 1) // 2
    L_pad = L + 2 * pad
    assert L_pad >= K, "sequence too short for this kernel_size"
    L_out = (L_pad - K) // stride + 1

    if L == 1:
        # Degenerate single-step series: every window averages identical values.
        return jnp.broadcast_to(x[:, 0:1, :], (B, L_out, C)).astype(x.dtype)

    # ---- lane-dense, time-major relayout: (B, L, C) -> (L, B*C) --------------
    N = B * C
    x2 = jnp.transpose(x, (1, 0, 2)).reshape(L, N)

    # ---- tiling: full 128-lane columns, budgeted against real VMEM use -------
    LANE = 128
    itemsize = x.dtype.itemsize
    base = (-pad) % 8                     # sublane-align the bulk scratch store
    buf_len = base + L_pad

    vmem_cap = _vmem_capacity_bytes()
    small_vmem = vmem_cap <= 96 * 1024 * 1024      # v7x-like: 64 MiB / TC, 2 TCs

    cols = _round_up(N, LANE) // LANE     # number of 128-lane columns needed
    # Real per-column footprint: double-buffered in/out blocks + f32 scratch
    # (level buffer + accumulator) + headroom for a couple of level-sized temps.
    per_col = (2 * L * itemsize + 2 * L_out * itemsize
               + (buf_len + L_out + 2 * L_pad) * 4) * LANE
    budget = int(0.6 * vmem_cap)
    cap_cols = 4 if small_vmem else 16    # 512 lanes on v7x, up to 2048 on v5e/v6e
    tile_cols = max(1, min(cols, cap_cols, budget // per_col))
    grid_n = -(-cols // tile_cols)

    if small_vmem and cols >= 2:
        # Dual-TensorCore chips: prefer an even number of equal-width tiles, but
        # only when it costs at most one extra padded 128-lane column.
        grid_even = max(2, grid_n + (grid_n % 2))
        tile_even = -(-cols // grid_even)
        if grid_even * tile_even - cols <= 1:
            grid_n = grid_even
    tile_cols = -(-cols // grid_n)        # equalize tile widths
    n_tile = tile_cols * LANE
    Np = grid_n * n_tile                  # padded lane count: no ragged tiles
    if Np != N:
        x2 = jnp.pad(x2, ((0, 0), (0, Np - N)))

    # ---- scratch & compiler params -------------------------------------------
    popcount = bin(K).count("1")
    scratch_shapes = []
    if K >= 2:
        scratch_shapes.append(pltpu.VMEM((buf_len, n_tile), jnp.float32))
        if stride == 1 and popcount >= 2:
            scratch_shapes.append(pltpu.VMEM((L_out, n_tile), jnp.float32))

    per_step = per_col * tile_cols
    vmem_limit = int(min(0.9 * vmem_cap, max(per_step + (2 << 20), 16 << 20)))

    if stride == 1 and K >= 2:
        n_passes = K.bit_length() + popcount
    else:
        n_passes = K
    cost = pl.CostEstimate(
        flops=int(n_passes * L_pad * Np),
        transcendentals=0,
        bytes_accessed=int((L + L_out) * Np * itemsize),
    )

    kernel = functools.partial(
        _moving_avg_kernel,
        K=K, stride=stride, pad=pad, base=base, L=L, L_out=L_out,
    )

    out2 = pl.pallas_call(
        kernel,
        out_shape=jax.ShapeDtypeStruct((L_out, Np), x.dtype),
        grid_spec=pltpu.PrefetchScalarGridSpec(
            num_scalar_prefetch=0,
            grid=(grid_n,),
            in_specs=[pl.BlockSpec((L, n_tile), lambda i: (0, i))],
            out_specs=pl.BlockSpec((L_out, n_tile), lambda i: (0, i)),
            scratch_shapes=scratch_shapes,
        ),
        compiler_params=pltpu.CompilerParams(
            dimension_semantics=("parallel",),
            vmem_limit_bytes=vmem_limit,
        ),
        cost_estimate=cost,
    )(x2)

    out2 = out2[:, :N]
    return jnp.transpose(out2.reshape(L_out, B, C), (1, 0, 2))


def _reference_moving_avg(x, kernel_size, stride):
    # Pure-JAX reference mirroring the PyTorch semantics exactly.
    pad = (kernel_size - 1) // 2
    front = jnp.repeat(x[:, 0:1, :], pad, axis=1)
    end = jnp.repeat(x[:, -1:, :], pad, axis=1)
    xpad = jnp.concatenate([front, x, end], axis=1)  # (B, L_pad, C)
    L_pad = xpad.shape[1]
    L_out = (L_pad - kernel_size) // stride + 1
    windows = jnp.stack(
        [xpad[:, j * stride: j * stride + kernel_size, :].mean(axis=1) for j in range(L_out)],
        axis=1,
    )
    return windows.astype(x.dtype)


if __name__ == "__main__":
    key = jax.random.PRNGKey(0)
    mov = jax.jit(moving_avg, static_argnums=(1, 2))

    # (B, L, C, kernel_size, stride) — odd / even / power-of-two kernels,
    # stride > 1, kernel_size == 1, and a multi-tile lane grid.
    configs = [
        (2, 16, 8, 5, 1),     # classic Autoformer-style odd kernel, stride 1
        (2, 16, 8, 4, 1),     # even kernel (L_out = L - 1)
        (2, 16, 8, 8, 1),     # power-of-two kernel (no accumulator scratch)
        (2, 16, 8, 4, 2),     # strided pooling path
        (2, 16, 8, 1, 2),     # kernel_size == 1 (pure strided subsample)
        (5, 24, 52, 7, 1),    # B*C = 260 -> multiple 128-lane tiles
    ]
    for (B, L, C, ks, st) in configs:
        k2, key = jax.random.split(key)
        x = jax.random.normal(k2, (B, L, C), dtype=jnp.float32)
        out = jax.block_until_ready(mov(x, ks, st))
        ref = _reference_moving_avg(x, ks, st)
        assert out.shape == ref.shape, (out.shape, ref.shape)
        assert jnp.allclose(out, ref, atol=1e-5, rtol=1e-5), (
            f"mismatch vs reference for config {(B, L, C, ks, st)}"
        )

    print("KERNEL_OK")
</pallas_src>

<mosaic_0001>
module attributes {stable_mosaic.version = 11 : i64} {
  func.func @_moving_avg_kernel(%arg0: i32, %arg1: memref<16x128xf32, #tpu.memory_space<vmem>>, %arg2: memref<16x128xf32, #tpu.memory_space<vmem>>, %arg3: memref<26x128xf32, #tpu.memory_space<vmem>>, %arg4: memref<16x128xf32, #tpu.memory_space<vmem>>) attributes {dimension_semantics = [#tpu.dimension_semantics<parallel>], iteration_bounds = array<i64: 1>, scalar_prefetch = 0 : i64, scratch_operands = 2 : i64, tpu.core_type = #tpu.core_type<tc>, window_params = [{transform_indices = @transform_0, window_bounds = array<i64: 16, 128>}, {transform_indices = @transform_1, window_bounds = array<i64: 16, 128>}]} {
    %c0 = arith.constant 0 : index
    %c0_0 = arith.constant 0 : index
    %0 = vector.load %arg1[%c0, %c0_0] : memref<16x128xf32, #tpu.memory_space<vmem>>, vector<1x128xf32>
    %c15 = arith.constant 15 : index
    %c0_1 = arith.constant 0 : index
    %1 = vector.load %arg1[%c15, %c0_1] : memref<16x128xf32, #tpu.memory_space<vmem>>, vector<1x128xf32>
    %2 = vector.shape_cast %0 : vector<1x128xf32> to vector<1x128xf32>
    %3 = vector.broadcast %2 : vector<1x128xf32> to vector<2x128xf32>
    %c0_2 = arith.constant 0 : index
    %c0_3 = arith.constant 0 : index
    %4 = vector.load %arg4[%c0_2, %c0_3] : memref<16x128xf32, #tpu.memory_space<vmem>>, vector<2x128xf32>
    tpu.vector_store %arg4[%c0_2, %c0_3], %3 {strides = array<i32>} : memref<16x128xf32, #tpu.memory_space<vmem>>, vector<2x128xf32>,
    %c0_4 = arith.constant 0 : index
    %c0_5 = arith.constant 0 : index
    %5 = vector.load %arg1[%c0_4, %c0_5] : memref<16x128xf32, #tpu.memory_space<vmem>>, vector<14x128xf32>
    %c2 = arith.constant 2 : index
    %c0_6 = arith.constant 0 : index
    %6 = vector.load %arg4[%c2, %c0_6] : memref<16x128xf32, #tpu.memory_space<vmem>>, vector<14x128xf32>
    tpu.vector_store %arg4[%c2, %c0_6], %5 {strides = array<i32>} : memref<16x128xf32, #tpu.memory_space<vmem>>, vector<14x128xf32>,
    %c0_7 = arith.constant 0 : index
    %c0_8 = arith.constant 0 : index
    %7 = vector.load %arg1[%c0_7, %c0_8] : memref<16x128xf32, #tpu.memory_space<vmem>>, vector<15x128xf32>
    %c1 = arith.constant 1 : index
    %c0_9 = arith.constant 0 : index
    %8 = vector.load %arg1[%c1, %c0_9] : memref<16x128xf32, #tpu.memory_space<vmem>>, vector<15x128xf32>
    %9 = arith.addf %7, %8 : vector<15x128xf32>
    %c8 = arith.constant 8 : index
    %c0_10 = arith.constant 0 : index
    %10 = vector.load %arg3[%c8, %c0_10] : memref<26x128xf32, #tpu.memory_space<vmem>>, vector<15x128xf32>
    tpu.vector_store %arg3[%c8, %c0_10], %9 {strides = array<i32>} : memref<26x128xf32, #tpu.memory_space<vmem>>, vector<15x128xf32>,
    %11 = arith.addf %0, %0 : vector<1x128xf32>
    %12 = vector.shape_cast %11 : vector<1x128xf32> to vector<1x128xf32>
    %13 = vector.broadcast %12 : vector<1x128xf32> to vector<2x128xf32>
    %c6 = arith.constant 6 : index
    %c0_11 = arith.constant 0 : index
    %14 = vector.load %arg3[%c6, %c0_11] : memref<26x128xf32, #tpu.memory_space<vmem>>, vector<2x128xf32>
    tpu.vector_store %arg3[%c6, %c0_11], %13 {strides = array<i32>} : memref<26x128xf32, #tpu.memory_space<vmem>>, vector<2x128xf32>,
    %15 = arith.addf %1, %1 : vector<1x128xf32>
    %16 = vector.shape_cast %15 : vector<1x128xf32> to vector<1x128xf32>
    %17 = vector.broadcast %16 : vector<1x128xf32> to vector<2x128xf32>
    %c23 = arith.constant 23 : index
    %c0_12 = arith.constant 0 : index
    %18 = vector.load %arg3[%c23, %c0_12] : memref<26x128xf32, #tpu.memory_space<vmem>>, vector<2x128xf32>
    tpu.vector_store %arg3[%c23, %c0_12], %17 {strides = array<i32>} : memref<26x128xf32, #tpu.memory_space<vmem>>, vector<2x128xf32>,
    %c6_13 = arith.constant 6 : index
    %c0_14 = arith.constant 0 : index
    %19 = vector.load %arg3[%c6_13, %c0_14] : memref<26x128xf32, #tpu.memory_space<vmem>>, vector<17x128xf32>
    %c8_15 = arith.constant 8 : index
    %c0_16 = arith.constant 0 : index
    %20 = vector.load %arg3[%c8_15, %c0_16] : memref<26x128xf32, #tpu.memory_space<vmem>>, vector<17x128xf32>
    %21 = arith.addf %19, %20 : vector<17x128xf32>
    %c6_17 = arith.constant 6 : index
    %c0_18 = arith.constant 0 : index
    %22 = vector.load %arg3[%c6_17, %c0_18] : memref<26x128xf32, #tpu.memory_space<vmem>>, vector<17x128xf32>
    tpu.vector_store %arg3[%c6_17, %c0_18], %21 {strides = array<i32>} : memref<26x128xf32, #tpu.memory_space<vmem>>, vector<17x128xf32>,
    %c7 = arith.constant 7 : index
    %c0_19 = arith.constant 0 : index
    %23 = vector.load %arg3[%c7, %c0_19] : memref<26x128xf32, #tpu.memory_space<vmem>>, vector<16x128xf32>
    %c0_20 = arith.constant 0 : index
    %c0_21 = arith.constant 0 : index
    %24 = vector.load %arg4[%c0_20, %c0_21] : memref<16x128xf32, #tpu.memory_space<vmem>>, vector<16x128xf32>
    %25 = arith.addf %24, %23 : vector<16x128xf32>
    %cst = arith.constant 2.000000e-01 : f32
    %26 = vector.broadcast %cst : f32 to vector<16x128xf32>
    %27 = arith.mulf %25, %26 : vector<16x128xf32>
    %c0_22 = arith.constant 0 : index
    %c0_23 = arith.constant 0 : index
    %28 = vector.load %arg2[%c0_22, %c0_23] : memref<16x128xf32, #tpu.memory_space<vmem>>, vector<16x128xf32>
    tpu.vector_store %arg2[%c0_22, %c0_23], %27 {strides = array<i32>} : memref<16x128xf32, #tpu.memory_space<vmem>>, vector<16x128xf32>,
    return
  }
  func.func @transform_0(%arg0: i32) -> (i32, i32) {
    %c0_i32 = arith.constant 0 : i32
    %c0_i32_0 = arith.constant 0 : i32
    return %c0_i32, %arg0 : i32, i32
  }
  func.func @transform_1(%arg0: i32) -> (i32, i32) {
    %c0_i32 = arith.constant 0 : i32
    %c0_i32_0 = arith.constant 0 : i32
    return %c0_i32, %arg0 : i32, i32
  }
}

</mosaic_0001>

<llo_original>
// kernel: moving_avg.1
$region0: #{moving_avg.1}
  #allocation0 [shape = 'u32[]', space=smem, size = 0x4, offset = 0x4, fixed_abs, tag = 'smem constant byte address 0x4 - core index']
  #allocation1 [shape = 'u32[144,128]{1,0:T(1,128)}', space=vmem, size = 0x12000, scoped, tag = 'internal scratch']
  #allocation2 [shape = 'f32[26,128]{1,0:T(8,128)}', space=vmem, size = 0x4000, scoped, tag = 'scratch operand']
  #allocation3 [shape = 'f32[16,128]{1,0:T(8,128)}', space=vmem, size = 0x2000, scoped, tag = 'scratch operand']
  %s0 = inlined_call_operand.vmem [shape: f32[16,128], index: 0, kind: input, shape index: {}]
  %s1 = inlined_call_operand.vmem [shape: f32[16,128], index: 1, kind: output, shape index: {}]
  %s2 = sld [smem:[#allocation0]]
  $region14: #{moving_avg.1} parent=0
    _
  %s4 = ssub.s32 1, %s2
  %s5 = scalar_select 0, %s4, %s2
  // Predicated region
  $region2: #{moving_avg.1} parent=0 // pred_check
    _
  $region3: #{moving_avg.1} parent=0 // pred_check_branch
    %7 = sbr.rel (0) target = $region5
  $region4: #{moving_avg.1} parent=0 // pred_region
    _
  $region5: #{moving_avg.1} parent=0 // pred_fallthru
    _
  %v8 = vld [vmem:[%s0] sm:$0x1]
  %v9 = vld [vmem:[%s0 + $0xf] sm:$0x1]
  %v10 = vlaneseq
  %v11 = vshrl.u32 %v10, 7
  %v12 = vsub.s32 0, %v11
  %v13 = vrot.slane %v8, %v12
  %14 = vst [vmem:[#allocation3] sm:$0x3] %v13
  %v15 = vld [vmem:[%s0] sm:$0xff]
  %v16 = vld [vmem:[%s0 + $0x8] sm:$0x3f]
  %17 = vst [vmem:[#allocation3 + $0x2] sm:$0xff] %v15
  %18 = vst [vmem:[#allocation3 + $0xa] sm:$0x3f] %v16
  %v19 = vld [vmem:[%s0] sm:$0xff]
  %v20 = vld [vmem:[%s0 + $0x8] sm:$0x7f]
  %v21 = vld [vmem:[%s0 + $0x1] sm:$0xff]
  %v22 = vld [vmem:[%s0 + $0x9] sm:$0x7f]
  %v23 = vadd.f32 %v19, %v21
  %v24 = vadd.f32 %v20, %v22
  %25 = vst [vmem:[#allocation2 + $0x8] sm:$0xff] %v23
  %26 = vst [vmem:[#allocation2 + $0x10] sm:$0x7f] %v24
  %v27 = vadd.f32 %v8, %v8
  %v28 = vlaneseq
  %v29 = vshrl.u32 %v28, 7
  %v30 = vsub.s32 0, %v29
  %v31 = vrot.slane %v27, %v30
  %32 = vst [vmem:[#allocation2 + $0x6] sm:$0x3] %v31
  %v33 = vadd.f32 %v9, %v9
  %v34 = vlaneseq
  %v35 = vshrl.u32 %v34, 7
  %v36 = vsub.s32 0, %v35
  %v37 = vrot.slane %v33, %v36
  %38 = vst [vmem:[#allocation2 + $0x17] sm:$0x3] %v37
  %v39 = vld [vmem:[#allocation2 + $0x6] sm:$0xff]
  %v40 = vld [vmem:[#allocation2 + $0xe] sm:$0xff]
  %v41 = vld [vmem:[#allocation2 + $0x16] sm:$0x1]
  %v42 = vld [vmem:[#allocation2 + $0x8] sm:$0xff]
  %v43 = vld [vmem:[#allocation2 + $0x10] sm:$0xff]
  %v44 = vld [vmem:[#allocation2 + $0x18] sm:$0x1]
  %v45 = vadd.f32 %v39, %v42
  %v46 = vadd.f32 %v40, %v43
  %v47 = vadd.f32 %v41, %v44
  %48 = vst [vmem:[#allocation2 + $0x6] sm:$0xff] %v45
  %49 = vst [vmem:[#allocation2 + $0xe] sm:$0xff] %v46
  %50 = vst [vmem:[#allocation2 + $0x16] sm:$0x1] %v47
  %v51 = vld [vmem:[#allocation2 + $0x7] sm:$0xff]
  %v52 = vld [vmem:[#allocation2 + $0xf] sm:$0xff]
  %v53 = vld [vmem:[#allocation3] sm:$0xff]
  %v54 = vld [vmem:[#allocation3 + $0x8] sm:$0xff]
  %v55 = vadd.f32 %v53, %v51
  %v56 = vadd.f32 %v54, %v52
  %v57 = vmul.f32 %v55, 0.2
  %v58 = vmul.f32 %v56, 0.2
  %59 = vst [vmem:[%s1] sm:$0xff] %v57
  %60 = vst [vmem:[%s1 + $0x8] sm:$0xff] %v58
  // Predicated region
  $region6: #{moving_avg.1} parent=0 // pred_check
    _
  $region7: #{moving_avg.1} parent=0 // pred_check_branch
    %62 = sbr.rel (0) target = $region9
  $region8: #{moving_avg.1} parent=0 // pred_region
    _
  $region9: #{moving_avg.1} parent=0 // pred_fallthru
    _
  // Predicated region
  $region10: #{moving_avg.1} parent=0 // pred_check
    _
  $region11: #{moving_avg.1} parent=0 // pred_check_branch
    %64 = sbr.rel (0) target = $region13
  $region12: #{moving_avg.1} parent=0 // pred_region
    _
  $region13: #{moving_avg.1} parent=0 // pred_fallthru
    _

</llo_original>
